<compile_context>
chip_gen: v5e
topology: v5e:2x2
jax: 0.10.0
libtpu: 0.0.40
codegen_flags: <defaults>
</compile_context>

<pallas_src>
import functools

import jax
import jax.numpy as jnp
from jax.experimental import pallas as pl
from jax.experimental.pallas import tpu as pltpu


def _round_up(x, m):
    return (x + m - 1) // m * m


def _fused_conv_relu_kernel(p_ref, w_ref, b_ref, o_ref):
    """All categories at once: one block-diagonal 3x3-conv-as-matmul + bias + ReLU.

    p_ref: (M, K_tot)     bf16 row-im2col patches, M = N*H, K_tot = ncat*K_pad
    w_ref: (K_tot, L_tot) bf16 block-diagonal Toeplitz conv weight, L_tot = ncat*W*Cout
    b_ref: (1, L_tot)     f32 per-category bias tiled over W
    o_ref: (M, L_tot)     f32 output (lane-dense, full-lane unmasked stores)
    """
    acc = jnp.dot(p_ref[...], w_ref[...], preferred_element_type=jnp.float32)
    acc = acc + b_ref[...]                       # f32 bias add on the VPU
    o_ref[...] = jnp.maximum(acc, 0.0)           # ReLU, full-lane store


def _build_toeplitz_weight(w, width):
    """(3, 3, Cin, Cout) conv weight -> (3*(width+2)*Cin, width*Cout) block-Toeplitz
    matrix so one row-im2col matmul produces a lane-dense (width*Cout) output row."""
    _, _, cin, cout = w.shape
    wp = width + 2
    dy, dx, wi, ci, co = jnp.meshgrid(
        jnp.arange(3), jnp.arange(3), jnp.arange(width),
        jnp.arange(cin), jnp.arange(cout), indexing="ij")
    rows = (dy * wp + wi + dx) * cin + ci          # position in the 3-row patch
    cols = wi * cout + co                          # lane-dense output position
    vals = w[dy, dx, ci, co]
    big = jnp.zeros((3 * wp * cin, width * cout), w.dtype)
    return big.at[rows.ravel(), cols.ravel()].set(vals.ravel())


def prepare_categorical_encoder_params(params_dict, width):
    """Hoisted per-parameter-set precompute (run once, NOT per forward).

    Builds the fused block-diagonal bf16 weight (ncat*K_pad, ncat*L) and the f32 bias
    (1, ncat*L).  Categories are laid out in sorted-name order, matching
    categorical_encoder_forward.
    TODO(synk): assumes all categories share (Cin, Cout, W); a real heterogeneous
                ModuleDict would need per-shape kernel instances.
    """
    names = sorted(params_dict.keys())
    ncat = len(names)
    blocks, biases = [], []
    for name in names:
        w, b = params_dict[name]
        cin = int(w.shape[2])
        k = 3 * (width + 2) * cin
        k_pad = _round_up(max(k, 256), 256)        # 216 -> 256: unmasked loads, clean packing
        blk = _build_toeplitz_weight(w, width)     # (k, width*cout)
        blk = jnp.pad(blk, ((0, k_pad - k), (0, 0)))
        blocks.append(blk)
        biases.append(jnp.tile(b, width))          # (width*cout,) lane-dense bias
    k_pad = blocks[0].shape[0]
    l = blocks[0].shape[1]
    w_big = jnp.zeros((ncat * k_pad, ncat * l), jnp.float32)
    for c, blk in enumerate(blocks):               # block-diagonal placement
        w_big = w_big.at[c * k_pad:(c + 1) * k_pad, c * l:(c + 1) * l].set(blk)
    w_big = w_big.astype(jnp.bfloat16)
    b_big = jnp.concatenate(biases).reshape(1, ncat * l).astype(jnp.float32)
    return w_big, b_big


@functools.partial(jax.jit, static_argnames=("nchw_output",))
def categorical_encoder_forward(x_dict, w_big, b_big, *, nchw_output=True):
    """y_dict[k] = encoder_k(x_dict[k]) — mirrors CategoricalEncoder.forward.

    All categories are fused into ONE pallas_call with a single grid step: one
    block-diagonal matmul covering every category and the whole batch.
    """
    names = sorted(x_dict.keys())
    ncat = len(names)
    x_stack = jnp.stack([x_dict[k] for k in names])        # (C, N, Cin, H, W)
    _, n, cin, h, width = x_stack.shape
    m = n * h                                              # matmul M (batch folded in)
    k = 3 * (width + 2) * cin                              # useful contraction per category
    k_pad = w_big.shape[0] // ncat                         # padded contraction per category
    l = w_big.shape[1] // ncat                             # lane-dense output per category
    cout = l // width
    k_tot = ncat * k_pad
    l_tot = ncat * l

    # Layout plumbing (fused by XLA under jit): NCHW -> NHWC, 1-px halo pad,
    # row-only im2col (dy folded into K, dx folded into the Toeplitz weight),
    # zero-pad each category's K block to k_pad, concatenate categories along K.
    x_nhwc = jnp.transpose(x_stack, (0, 1, 3, 4, 2))
    x_pad = jnp.pad(x_nhwc, ((0, 0), (0, 0), (1, 1), (1, 1), (0, 0)))
    p = jnp.stack([x_pad[:, :, dy:dy + h] for dy in range(3)], axis=3)
    p = p.reshape(ncat, m, k)
    p = jnp.pad(p, ((0, 0), (0, 0), (0, k_pad - k)))
    p = jnp.transpose(p, (1, 0, 2)).reshape(m, k_tot).astype(jnp.bfloat16)

    cost = pl.CostEstimate(
        flops=2 * m * k_tot * l_tot,
        transcendentals=0,
        bytes_accessed=m * k_tot * 2 + k_tot * l_tot * 2 + l_tot * 4 + m * l_tot * 4)

    y = pl.pallas_call(
        _fused_conv_relu_kernel,
        out_shape=jax.ShapeDtypeStruct((m, l_tot), jnp.float32),
        grid=(1,),                                          # single step: no per-category overhead
        in_specs=[
            pl.BlockSpec((m, k_tot), lambda i: (0, 0)),
            pl.BlockSpec((k_tot, l_tot), lambda i: (0, 0)),
            pl.BlockSpec((1, l_tot), lambda i: (0, 0)),
        ],
        out_specs=pl.BlockSpec((m, l_tot), lambda i: (0, 0)),
        compiler_params=pltpu.CompilerParams(
            dimension_semantics=("arbitrary",)),
        cost_estimate=cost,
    )(p, w_big, b_big)

    # (N*H, ncat*W*Cout) -> (N, H, ncat, W, Cout)
    y = y.reshape(n, h, ncat, width, cout)
    if nchw_output:
        # PyTorch Conv2d convention (lane-sparse epilogue; kept for semantic parity).
        y = jnp.transpose(y, (2, 0, 4, 1, 3))               # (C, N, Cout, H, W)
        return {name: y[c] for c, name in enumerate(names)}
    # Lane-dense alternative for consumers that permit it: last dim = W*Cout = 128.
    y = jnp.transpose(y, (2, 0, 1, 3, 4)).reshape(ncat, n, h, width * cout)
    return {name: y[c] for c, name in enumerate(names)}


def make_category_params(key, cin, cout):
    kw, kb = jax.random.split(key)
    # Deterministic "Kaiming-ish" init; layout (kh, kw, Cin, Cout).
    w = jax.random.normal(kw, (3, 3, cin, cout), jnp.float32) * 0.1
    b = jax.random.normal(kb, (cout,), jnp.float32) * 0.01
    return w, b


def _reference_conv3x3_relu_nchw(x, w, b):
    """Pure-JAX reference with matching numerics (bf16 operands, f32 accumulate)."""
    n, cin, h, width = x.shape
    cout = w.shape[-1]
    xb = jnp.transpose(x, (0, 2, 3, 1)).astype(jnp.bfloat16)
    xp = jnp.pad(xb, ((0, 0), (1, 1), (1, 1), (0, 0)))
    wb = w.astype(jnp.bfloat16)
    acc = jnp.zeros((n, h, width, cout), jnp.float32)
    for dy in range(3):
        for dx in range(3):
            acc = acc + jnp.einsum(
                "nhwc,co->nhwo", xp[:, dy:dy + h, dx:dx + width, :], wb[dy, dx],
                preferred_element_type=jnp.float32)
    acc = acc + b.reshape(1, 1, 1, cout)
    y = jnp.maximum(acc, 0.0)
    return jnp.transpose(y, (0, 3, 1, 2))


if __name__ == "__main__":
    key = jax.random.PRNGKey(0)
    N, Cin, H, W = 2, 4, 16, 16
    Cout = 8
    categories = ["player", "enemy"]

    # Deterministic inputs and per-category parameters.
    keys = jax.random.split(key, 2 * len(categories))
    x_dict = {}
    params_dict = {}
    for i, cat in enumerate(categories):
        x_dict[cat] = jax.random.normal(keys[2 * i], (N, Cin, H, W), jnp.float32)
        params_dict[cat] = make_category_params(keys[2 * i + 1], Cin, Cout)

    # Hoisted once-per-parameter-set precompute (block-diagonal Toeplitz weight + bias).
    w_big, b_big = prepare_categorical_encoder_params(params_dict, W)
    w_big, b_big = jax.block_until_ready(w_big), jax.block_until_ready(b_big)

    y_dict = categorical_encoder_forward(x_dict, w_big, b_big)
    y_dict = jax.tree_util.tree_map(jax.block_until_ready, y_dict)

    # Sanity check against a pure-JAX reference with matching bf16/f32 numerics.
    for cat in categories:
        w, b = params_dict[cat]
        ref = _reference_conv3x3_relu_nchw(x_dict[cat], w, b)
        assert y_dict[cat].shape == (N, Cout, H, W), cat
        assert jnp.allclose(y_dict[cat], ref, atol=2e-3, rtol=2e-3), cat

    print("KERNEL_OK")
</pallas_src>

<mosaic_0001>
module attributes {stable_mosaic.version = 11 : i64} {
  func.func @_fused_conv_relu_kernel(%arg0: i32, %arg1: memref<32x512xbf16, #tpu.memory_space<vmem>>, %arg2: memref<512x256xbf16, #tpu.memory_space<vmem>>, %arg3: memref<1x256xf32, #tpu.memory_space<vmem>>, %arg4: memref<32x256xf32, #tpu.memory_space<vmem>>) attributes {dimension_semantics = [#tpu.dimension_semantics<arbitrary>], iteration_bounds = array<i64: 1>, scalar_prefetch = 0 : i64, scratch_operands = 0 : i64, tpu.core_type = #tpu.core_type<tc>, window_params = [{pipeline_mode = #tpu.pipeline_mode<synchronous>, transform_indices = @transform_0, window_bounds = array<i64: 32, 512>}, {pipeline_mode = #tpu.pipeline_mode<synchronous>, transform_indices = @transform_1, window_bounds = array<i64: 512, 256>}, {pipeline_mode = #tpu.pipeline_mode<synchronous>, transform_indices = @transform_2, window_bounds = array<i64: 1, 256>}, {pipeline_mode = #tpu.pipeline_mode<synchronous>, transform_indices = @transform_3, window_bounds = array<i64: 32, 256>}]} {
    %c0 = arith.constant 0 : index
    %c0_0 = arith.constant 0 : index
    %0 = vector.load %arg1[%c0, %c0_0] : memref<32x512xbf16, #tpu.memory_space<vmem>>, vector<32x512xbf16>
    %c0_1 = arith.constant 0 : index
    %c0_2 = arith.constant 0 : index
    %1 = vector.load %arg2[%c0_1, %c0_2] : memref<512x256xbf16, #tpu.memory_space<vmem>>, vector<512x256xbf16>
    %cst = arith.constant dense<0.000000e+00> : vector<32x256xf32>
    %2 = tpu.matmul %0, %1, %cst {dimension_numbers = #tpu.dot_dimension_numbers<[1], [0], [0], [1], [0, 0, 1, 1], [], []>} : vector<32x512xbf16>, vector<512x256xbf16>, vector<32x256xf32> -> vector<32x256xf32>
    %c0_3 = arith.constant 0 : index
    %c0_4 = arith.constant 0 : index
    %3 = vector.load %arg3[%c0_3, %c0_4] : memref<1x256xf32, #tpu.memory_space<vmem>>, vector<1x256xf32>
    %4 = vector.broadcast %3 : vector<1x256xf32> to vector<32x256xf32>
    %5 = arith.addf %2, %4 : vector<32x256xf32>
    %cst_5 = arith.constant 0.000000e+00 : f32
    %6 = vector.broadcast %cst_5 : f32 to vector<32x256xf32>
    %7 = arith.maximumf %5, %6 : vector<32x256xf32>
    %c0_6 = arith.constant 0 : index
    %c0_7 = arith.constant 0 : index
    %8 = vector.load %arg4[%c0_6, %c0_7] : memref<32x256xf32, #tpu.memory_space<vmem>>, vector<32x256xf32>
    tpu.vector_store %arg4[%c0_6, %c0_7], %7 {strides = array<i32>} : memref<32x256xf32, #tpu.memory_space<vmem>>, vector<32x256xf32>,
    return
  }
  func.func @transform_0(%arg0: i32) -> (i32, i32) {
    %c0_i32 = arith.constant 0 : i32
    %c0_i32_0 = arith.constant 0 : i32
    %c0_i32_1 = arith.constant 0 : i32
    return %c0_i32, %c0_i32_0 : i32, i32
  }
  func.func @transform_1(%arg0: i32) -> (i32, i32) {
    %c0_i32 = arith.constant 0 : i32
    %c0_i32_0 = arith.constant 0 : i32
    %c0_i32_1 = arith.constant 0 : i32
    return %c0_i32, %c0_i32_0 : i32, i32
  }
  func.func @transform_2(%arg0: i32) -> (i32, i32) {
    %c0_i32 = arith.constant 0 : i32
    %c0_i32_0 = arith.constant 0 : i32
    %c0_i32_1 = arith.constant 0 : i32
    return %c0_i32, %c0_i32_0 : i32, i32
  }
  func.func @transform_3(%arg0: i32) -> (i32, i32) {
    %c0_i32 = arith.constant 0 : i32
    %c0_i32_0 = arith.constant 0 : i32
    %c0_i32_1 = arith.constant 0 : i32
    return %c0_i32, %c0_i32_0 : i32, i32
  }
}

</mosaic_0001>

<llo_original>
// kernel: categorical_encoder_forward.1
$region0: #{categorical_encoder_forward.1}
  #allocation0 [shape = 'u32[]', space=smem, size = 0x4, offset = 0x4, fixed_abs, tag = 'smem constant byte address 0x4 - core index']
  #allocation1 [shape = 'u32[72,128]{1,0:T(1,128)}', space=vmem, size = 0x9000, scoped, tag = 'internal scratch']
  %s0 = inlined_call_operand.vmem [shape: bf16[32,512], index: 0, kind: input, shape index: {}]
  %s1 = inlined_call_operand.vmem [shape: bf16[512,256], index: 1, kind: input, shape index: {}]
  %s2 = inlined_call_operand.vmem [shape: f32[1,256], index: 2, kind: input, shape index: {}]
  %s3 = inlined_call_operand.vmem [shape: f32[32,256], index: 3, kind: output, shape index: {}]
  %s4 = sld [smem:[#allocation0]]
  $region22: #{categorical_encoder_forward.1} parent=0
    _
  %s6 = ssub.s32 1, %s4
  %s7 = scalar_select 0, %s6, %s4
  // Predicated region
  $region2: #{categorical_encoder_forward.1} parent=0 // pred_check
    _
  $region3: #{categorical_encoder_forward.1} parent=0 // pred_check_branch
    %9 = sbr.rel (0) target = $region5
  $region4: #{categorical_encoder_forward.1} parent=0 // pred_region
    _
  $region5: #{categorical_encoder_forward.1} parent=0 // pred_fallthru
    _
  // Predicated region
  $region6: #{categorical_encoder_forward.1} parent=0 // pred_check
    _
  $region7: #{categorical_encoder_forward.1} parent=0 // pred_check_branch
    %11 = sbr.rel (0) target = $region9
  $region8: #{categorical_encoder_forward.1} parent=0 // pred_region
    _
  $region9: #{categorical_encoder_forward.1} parent=0 // pred_fallthru
    _
  // Predicated region
  $region10: #{categorical_encoder_forward.1} parent=0 // pred_check
    _
  $region11: #{categorical_encoder_forward.1} parent=0 // pred_check_branch
    %13 = sbr.rel (0) target = $region13
  $region12: #{categorical_encoder_forward.1} parent=0 // pred_region
    _
  $region13: #{categorical_encoder_forward.1} parent=0 // pred_fallthru
    _
  %v14 = vld [vmem:[%s0] sm:$0xff]
  %v15 = vld [vmem:[%s0 + $0x8] sm:$0xff]
  %v16 = vld [vmem:[%s0 + $0x10] sm:$0xff]
  %v17 = vld [vmem:[%s0 + $0x18] sm:$0xff]
  %v18 = vld [vmem:[%s0 + $0x20] sm:$0xff]
  %v19 = vld [vmem:[%s0 + $0x28] sm:$0xff]
  %v20 = vld [vmem:[%s0 + $0x30] sm:$0xff]
  %v21 = vld [vmem:[%s0 + $0x38] sm:$0xff]
  %v22 = vld [vmem:[%s1] sm:$0xff]
  %v23 = vld [vmem:[%s1 + $0x8] sm:$0xff]
  %v24 = vld [vmem:[%s1 + $0x10] sm:$0xff]
  %v25 = vld [vmem:[%s1 + $0x18] sm:$0xff]
  %v26 = vld [vmem:[%s1 + $0x20] sm:$0xff]
  %v27 = vld [vmem:[%s1 + $0x28] sm:$0xff]
  %v28 = vld [vmem:[%s1 + $0x30] sm:$0xff]
  %v29 = vld [vmem:[%s1 + $0x38] sm:$0xff]
  %v30 = vld [vmem:[%s1 + $0x40] sm:$0xff]
  %v31 = vld [vmem:[%s1 + $0x48] sm:$0xff]
  %v32 = vld [vmem:[%s1 + $0x50] sm:$0xff]
  %v33 = vld [vmem:[%s1 + $0x58] sm:$0xff]
  %v34 = vld [vmem:[%s1 + $0x60] sm:$0xff]
  %v35 = vld [vmem:[%s1 + $0x68] sm:$0xff]
  %v36 = vld [vmem:[%s1 + $0x70] sm:$0xff]
  %v37 = vld [vmem:[%s1 + $0x78] sm:$0xff]
  %v38 = vld [vmem:[%s1 + $0x80] sm:$0xff]
  %v39 = vld [vmem:[%s1 + $0x88] sm:$0xff]
  %v40 = vld [vmem:[%s1 + $0x90] sm:$0xff]
  %v41 = vld [vmem:[%s1 + $0x98] sm:$0xff]
  %v42 = vld [vmem:[%s1 + $0xa0] sm:$0xff]
  %v43 = vld [vmem:[%s1 + $0xa8] sm:$0xff]
  %v44 = vld [vmem:[%s1 + $0xb0] sm:$0xff]
  %v45 = vld [vmem:[%s1 + $0xb8] sm:$0xff]
  %v46 = vld [vmem:[%s1 + $0xc0] sm:$0xff]
  %v47 = vld [vmem:[%s1 + $0xc8] sm:$0xff]
  %v48 = vld [vmem:[%s1 + $0xd0] sm:$0xff]
  %v49 = vld [vmem:[%s1 + $0xd8] sm:$0xff]
  %v50 = vld [vmem:[%s1 + $0xe0] sm:$0xff]
  %v51 = vld [vmem:[%s1 + $0xe8] sm:$0xff]
  %v52 = vld [vmem:[%s1 + $0xf0] sm:$0xff]
  %v53 = vld [vmem:[%s1 + $0xf8] sm:$0xff]
  %v54 = vld [vmem:[%s1 + $0x100] sm:$0xff]
  %v55 = vld [vmem:[%s1 + $0x108] sm:$0xff]
  %v56 = vld [vmem:[%s1 + $0x110] sm:$0xff]
  %v57 = vld [vmem:[%s1 + $0x118] sm:$0xff]
  %v58 = vld [vmem:[%s1 + $0x120] sm:$0xff]
  %v59 = vld [vmem:[%s1 + $0x128] sm:$0xff]
  %v60 = vld [vmem:[%s1 + $0x130] sm:$0xff]
  %v61 = vld [vmem:[%s1 + $0x138] sm:$0xff]
  %v62 = vld [vmem:[%s1 + $0x140] sm:$0xff]
  %v63 = vld [vmem:[%s1 + $0x148] sm:$0xff]
  %v64 = vld [vmem:[%s1 + $0x150] sm:$0xff]
  %v65 = vld [vmem:[%s1 + $0x158] sm:$0xff]
  %v66 = vld [vmem:[%s1 + $0x160] sm:$0xff]
  %v67 = vld [vmem:[%s1 + $0x168] sm:$0xff]
  %v68 = vld [vmem:[%s1 + $0x170] sm:$0xff]
  %v69 = vld [vmem:[%s1 + $0x178] sm:$0xff]
  %v70 = vld [vmem:[%s1 + $0x180] sm:$0xff]
  %v71 = vld [vmem:[%s1 + $0x188] sm:$0xff]
  %v72 = vld [vmem:[%s1 + $0x190] sm:$0xff]
  %v73 = vld [vmem:[%s1 + $0x198] sm:$0xff]
  %v74 = vld [vmem:[%s1 + $0x1a0] sm:$0xff]
  %v75 = vld [vmem:[%s1 + $0x1a8] sm:$0xff]
  %v76 = vld [vmem:[%s1 + $0x1b0] sm:$0xff]
  %v77 = vld [vmem:[%s1 + $0x1b8] sm:$0xff]
  %v78 = vld [vmem:[%s1 + $0x1c0] sm:$0xff]
  %v79 = vld [vmem:[%s1 + $0x1c8] sm:$0xff]
  %v80 = vld [vmem:[%s1 + $0x1d0] sm:$0xff]
  %v81 = vld [vmem:[%s1 + $0x1d8] sm:$0xff]
  %v82 = vld [vmem:[%s1 + $0x1e0] sm:$0xff]
  %v83 = vld [vmem:[%s1 + $0x1e8] sm:$0xff]
  %v84 = vld [vmem:[%s1 + $0x1f0] sm:$0xff]
  %v85 = vld [vmem:[%s1 + $0x1f8] sm:$0xff]
  %v86 = vld [vmem:[%s2] sm:$0x3]
  %v88 = vperm.slane %v86, 0
  %v89 = vperm.slane %v86, 1
  %v100 = vunpack.c.l.b16 %v14
  %v101 = vunpack.c.h.b16 %v14
  %v102 = vunpack.c.l.b16 %v15
  %v103 = vunpack.c.h.b16 %v15
  %v104 = vunpack.c.l.b16 %v16
  %v105 = vunpack.c.h.b16 %v16
  %v106 = vunpack.c.l.b16 %v17
  %v107 = vunpack.c.h.b16 %v17
  %v108 = vunpack.c.l.b16 %v18
  %v109 = vunpack.c.h.b16 %v18
  %v110 = vunpack.c.l.b16 %v19
  %v111 = vunpack.c.h.b16 %v19
  %v112 = vunpack.c.l.b16 %v20
  %v113 = vunpack.c.h.b16 %v20
  %v114 = vunpack.c.l.b16 %v21
  %v115 = vunpack.c.h.b16 %v21
  %v116 = vpack.c.b16 %v104, %v100
  %v117 = vpack.c.b16 %v105, %v101
  %v118 = vpack.c.b16 %v106, %v102
  %v119 = vpack.c.b16 %v107, %v103
  %v120 = vpack.c.b16 %v112, %v108
  %v121 = vpack.c.b16 %v113, %v109
  %v122 = vpack.c.b16 %v114, %v110
  %v123 = vpack.c.b16 %v115, %v111
  %v196 = vunpack.c.l.b16 %v22
  %v197 = vunpack.c.h.b16 %v22
  %v198 = vunpack.c.l.b16 %v23
  %v199 = vunpack.c.h.b16 %v23
  %v200 = vunpack.c.l.b16 %v24
  %v201 = vunpack.c.h.b16 %v24
  %v202 = vunpack.c.l.b16 %v25
  %v203 = vunpack.c.h.b16 %v25
  %v204 = vunpack.c.l.b16 %v26
  %v205 = vunpack.c.h.b16 %v26
  %v206 = vunpack.c.l.b16 %v27
  %v207 = vunpack.c.h.b16 %v27
  %v208 = vunpack.c.l.b16 %v28
  %v209 = vunpack.c.h.b16 %v28
  %v210 = vunpack.c.l.b16 %v29
  %v211 = vunpack.c.h.b16 %v29
  %v212 = vunpack.c.l.b16 %v30
  %v213 = vunpack.c.h.b16 %v30
  %v214 = vunpack.c.l.b16 %v31
  %v215 = vunpack.c.h.b16 %v31
  %v216 = vunpack.c.l.b16 %v32
  %v217 = vunpack.c.h.b16 %v32
  %v218 = vunpack.c.l.b16 %v33
  %v219 = vunpack.c.h.b16 %v33
  %v220 = vunpack.c.l.b16 %v34
  %v221 = vunpack.c.h.b16 %v34
  %v222 = vunpack.c.l.b16 %v35
  %v223 = vunpack.c.h.b16 %v35
  %v224 = vunpack.c.l.b16 %v36
  %v225 = vunpack.c.h.b16 %v36
  %v226 = vunpack.c.l.b16 %v37
  %v227 = vunpack.c.h.b16 %v37
  %v228 = vunpack.c.l.b16 %v38
  %v229 = vunpack.c.h.b16 %v38
  %v230 = vunpack.c.l.b16 %v39
  %v231 = vunpack.c.h.b16 %v39
  %v232 = vunpack.c.l.b16 %v40
  %v233 = vunpack.c.h.b16 %v40
  %v234 = vunpack.c.l.b16 %v41
  %v235 = vunpack.c.h.b16 %v41
  %v236 = vunpack.c.l.b16 %v42
  %v237 = vunpack.c.h.b16 %v42
  %v238 = vunpack.c.l.b16 %v43
  %v239 = vunpack.c.h.b16 %v43
  %v240 = vunpack.c.l.b16 %v44
  %v241 = vunpack.c.h.b16 %v44
  %v242 = vunpack.c.l.b16 %v45
  %v243 = vunpack.c.h.b16 %v45
  %v244 = vunpack.c.l.b16 %v46
  %v245 = vunpack.c.h.b16 %v46
  %v246 = vunpack.c.l.b16 %v47
  %v247 = vunpack.c.h.b16 %v47
  %v248 = vunpack.c.l.b16 %v48
  %v249 = vunpack.c.h.b16 %v48
  %v250 = vunpack.c.l.b16 %v49
  %v251 = vunpack.c.h.b16 %v49
  %v252 = vunpack.c.l.b16 %v50
  %v253 = vunpack.c.h.b16 %v50
  %v254 = vunpack.c.l.b16 %v51
  %v255 = vunpack.c.h.b16 %v51
  %v256 = vunpack.c.l.b16 %v52
  %v257 = vunpack.c.h.b16 %v52
  %v258 = vunpack.c.l.b16 %v53
  %v259 = vunpack.c.h.b16 %v53
  %v260 = vunpack.c.l.b16 %v54
  %v261 = vunpack.c.h.b16 %v54
  %v262 = vunpack.c.l.b16 %v55
  %v263 = vunpack.c.h.b16 %v55
  %v264 = vunpack.c.l.b16 %v56
  %v265 = vunpack.c.h.b16 %v56
  %v266 = vunpack.c.l.b16 %v57
  %v267 = vunpack.c.h.b16 %v57
  %v268 = vunpack.c.l.b16 %v58
  %v269 = vunpack.c.h.b16 %v58
  %v270 = vunpack.c.l.b16 %v59
  %v271 = vunpack.c.h.b16 %v59
  %v272 = vunpack.c.l.b16 %v60
  %v273 = vunpack.c.h.b16 %v60
  %v274 = vunpack.c.l.b16 %v61
  %v275 = vunpack.c.h.b16 %v61
  %v276 = vunpack.c.l.b16 %v62
  %v277 = vunpack.c.h.b16 %v62
  %v278 = vunpack.c.l.b16 %v63
  %v279 = vunpack.c.h.b16 %v63
  %v280 = vunpack.c.l.b16 %v64
  %v281 = vunpack.c.h.b16 %v64
  %v282 = vunpack.c.l.b16 %v65
  %v283 = vunpack.c.h.b16 %v65
  %v284 = vunpack.c.l.b16 %v66
  %v285 = vunpack.c.h.b16 %v66
  %v286 = vunpack.c.l.b16 %v67
  %v287 = vunpack.c.h.b16 %v67
  %v288 = vunpack.c.l.b16 %v68
  %v289 = vunpack.c.h.b16 %v68
  %v290 = vunpack.c.l.b16 %v69
  %v291 = vunpack.c.h.b16 %v69
  %v292 = vunpack.c.l.b16 %v70
  %v293 = vunpack.c.h.b16 %v70
  %v294 = vunpack.c.l.b16 %v71
  %v295 = vunpack.c.h.b16 %v71
  %v296 = vunpack.c.l.b16 %v72
  %v297 = vunpack.c.h.b16 %v72
  %v298 = vunpack.c.l.b16 %v73
  %v299 = vunpack.c.h.b16 %v73
  %v300 = vunpack.c.l.b16 %v74
  %v301 = vunpack.c.h.b16 %v74
  %v302 = vunpack.c.l.b16 %v75
  %v303 = vunpack.c.h.b16 %v75
  %v304 = vunpack.c.l.b16 %v76
  %v305 = vunpack.c.h.b16 %v76
  %v306 = vunpack.c.l.b16 %v77
  %v307 = vunpack.c.h.b16 %v77
  %v308 = vunpack.c.l.b16 %v78
  %v309 = vunpack.c.h.b16 %v78
  %v310 = vunpack.c.l.b16 %v79
  %v311 = vunpack.c.h.b16 %v79
  %v312 = vunpack.c.l.b16 %v80
  %v313 = vunpack.c.h.b16 %v80
  %v314 = vunpack.c.l.b16 %v81
  %v315 = vunpack.c.h.b16 %v81
  %v316 = vunpack.c.l.b16 %v82
  %v317 = vunpack.c.h.b16 %v82
  %v318 = vunpack.c.l.b16 %v83
  %v319 = vunpack.c.h.b16 %v83
  %v320 = vunpack.c.l.b16 %v84
  %v321 = vunpack.c.h.b16 %v84
  %v322 = vunpack.c.l.b16 %v85
  %v323 = vunpack.c.h.b16 %v85
  %v324 = vpack.c.b16 %v198, %v196
  %v325 = vpack.c.b16 %v199, %v197
  %v326 = vpack.c.b16 %v202, %v200
  %v327 = vpack.c.b16 %v203, %v201
  %v328 = vpack.c.b16 %v206, %v204
  %v329 = vpack.c.b16 %v207, %v205
  %v330 = vpack.c.b16 %v210, %v208
  %v331 = vpack.c.b16 %v211, %v209
  %v332 = vpack.c.b16 %v214, %v212
  %v333 = vpack.c.b16 %v215, %v213
  %v334 = vpack.c.b16 %v218, %v216
  %v335 = vpack.c.b16 %v219, %v217
  %v336 = vpack.c.b16 %v222, %v220
  %v337 = vpack.c.b16 %v223, %v221
  %v338 = vpack.c.b16 %v226, %v224
  %v339 = vpack.c.b16 %v227, %v225
  %v340 = vpack.c.b16 %v230, %v228
  %v341 = vpack.c.b16 %v231, %v229
  %v342 = vpack.c.b16 %v234, %v232
  %v343 = vpack.c.b16 %v235, %v233
  %v344 = vpack.c.b16 %v238, %v236
  %v345 = vpack.c.b16 %v239, %v237
  %v346 = vpack.c.b16 %v242, %v240
  %v347 = vpack.c.b16 %v243, %v241
  %v348 = vpack.c.b16 %v246, %v244
  %v349 = vpack.c.b16 %v247, %v245
  %v350 = vpack.c.b16 %v250, %v248
  %v351 = vpack.c.b16 %v251, %v249
  %v352 = vpack.c.b16 %v254, %v252
  %v353 = vpack.c.b16 %v255, %v253
  %v354 = vpack.c.b16 %v258, %v256
  %v355 = vpack.c.b16 %v259, %v257
  %v356 = vpack.c.b16 %v262, %v260
  %v357 = vpack.c.b16 %v263, %v261
  %v358 = vpack.c.b16 %v266, %v264
  %v359 = vpack.c.b16 %v267, %v265
  %v360 = vpack.c.b16 %v270, %v268
  %v361 = vpack.c.b16 %v271, %v269
  %v362 = vpack.c.b16 %v274, %v272
  %v363 = vpack.c.b16 %v275, %v273
  %v364 = vpack.c.b16 %v278, %v276
  %v365 = vpack.c.b16 %v279, %v277
  %v366 = vpack.c.b16 %v282, %v280
  %v367 = vpack.c.b16 %v283, %v281
  %v368 = vpack.c.b16 %v286, %v284
  %v369 = vpack.c.b16 %v287, %v285
  %v370 = vpack.c.b16 %v290, %v288
  %v371 = vpack.c.b16 %v291, %v289
  %v372 = vpack.c.b16 %v294, %v292
  %v373 = vpack.c.b16 %v295, %v293
  %v374 = vpack.c.b16 %v298, %v296
  %v375 = vpack.c.b16 %v299, %v297
  %v376 = vpack.c.b16 %v302, %v300
  %v377 = vpack.c.b16 %v303, %v301
  %v378 = vpack.c.b16 %v306, %v304
  %v379 = vpack.c.b16 %v307, %v305
  %v380 = vpack.c.b16 %v310, %v308
  %v381 = vpack.c.b16 %v311, %v309
  %v382 = vpack.c.b16 %v314, %v312
  %v383 = vpack.c.b16 %v315, %v313
  %v384 = vpack.c.b16 %v318, %v316
  %v385 = vpack.c.b16 %v319, %v317
  %v386 = vpack.c.b16 %v322, %v320
  %v387 = vpack.c.b16 %v323, %v321
  %452 = vmatpush.bf16.msra.mxu0 %v338
  %453 = vmatpush.bf16.msra.mxu0 %v336
  %454 = vmatpush.bf16.msra.mxu0 %v334
  %455 = vmatpush.bf16.msra.mxu0 %v332
  %456 = vmatpush.bf16.msra.mxu0 %v330
  %457 = vmatpush.bf16.msra.mxu0 %v328
  %458 = vmatpush.bf16.msra.mxu0 %v326
  %459 = vmatpush.bf16.msra.mxu0 %v324
  %460 = vmatmul.bf16.gmra.mxu0 %v116
  %v461 = vpop.f32.mrf.mxu0
  %v462 = vadd.f32 %v88, %v461
  %v463 = vpop.f32.mrf.mxu0
  %v464 = vadd.f32 %v88, %v463
  %465 = vmatmul.bf16.gmra.mxu0 %v120
  %v466 = vpop.f32.mrf.mxu0
  %v467 = vadd.f32 %v88, %v466
  %v468 = vpop.f32.mrf.mxu0
  %v469 = vadd.f32 %v88, %v468
  %470 = vdwg.mxu0
  %471 = vmatpush.bf16.msra.mxu0 %v354
  %472 = vmatpush.bf16.msra.mxu0 %v352
  %473 = vmatpush.bf16.msra.mxu0 %v350
  %474 = vmatpush.bf16.msra.mxu0 %v348
  %475 = vmatpush.bf16.msra.mxu0 %v346
  %476 = vmatpush.bf16.msra.mxu0 %v344
  %477 = vmatpush.bf16.msra.mxu0 %v342
  %478 = vmatpush.bf16.msra.mxu0 %v340
  %479 = vmatmul.bf16.gmra.mxu0 %v117
  %v480 = vpop.f32.mrf.mxu0
  %v481 = vadd.f32 %v462, %v480
  %v482 = vpop.f32.mrf.mxu0
  %v483 = vadd.f32 %v464, %v482
  %484 = vmatmul.bf16.gmra.mxu0 %v121
  %v485 = vpop.f32.mrf.mxu0
  %v486 = vadd.f32 %v467, %v485
  %v487 = vpop.f32.mrf.mxu0
  %v488 = vadd.f32 %v469, %v487
  %489 = vdwg.mxu0
  %490 = vmatpush.bf16.msra.mxu0 %v370
  %491 = vmatpush.bf16.msra.mxu0 %v368
  %492 = vmatpush.bf16.msra.mxu0 %v366
  %493 = vmatpush.bf16.msra.mxu0 %v364
  %494 = vmatpush.bf16.msra.mxu0 %v362
  %495 = vmatpush.bf16.msra.mxu0 %v360
  %496 = vmatpush.bf16.msra.mxu0 %v358
  %497 = vmatpush.bf16.msra.mxu0 %v356
  %498 = vmatmul.bf16.gmra.mxu0 %v118
  %v499 = vpop.f32.mrf.mxu0
  %v500 = vadd.f32 %v481, %v499
  %v501 = vpop.f32.mrf.mxu0
  %v502 = vadd.f32 %v483, %v501
  %503 = vmatmul.bf16.gmra.mxu0 %v122
  %v504 = vpop.f32.mrf.mxu0
  %v505 = vadd.f32 %v486, %v504
  %v506 = vpop.f32.mrf.mxu0
  %v507 = vadd.f32 %v488, %v506
  %508 = vdwg.mxu0
  %509 = vmatpush.bf16.msra.mxu0 %v386
  %510 = vmatpush.bf16.msra.mxu0 %v384
  %511 = vmatpush.bf16.msra.mxu0 %v382
  %512 = vmatpush.bf16.msra.mxu0 %v380
  %513 = vmatpush.bf16.msra.mxu0 %v378
  %514 = vmatpush.bf16.msra.mxu0 %v376
  %515 = vmatpush.bf16.msra.mxu0 %v374
  %516 = vmatpush.bf16.msra.mxu0 %v372
  %517 = vmatmul.bf16.gmra.mxu0 %v119
  %v518 = vpop.f32.mrf.mxu0
  %v519 = vadd.f32 %v500, %v518
  %v520 = vpop.f32.mrf.mxu0
  %v521 = vadd.f32 %v502, %v520
  %522 = vmatmul.bf16.gmra.mxu0 %v123
  %v523 = vpop.f32.mrf.mxu0
  %v524 = vadd.f32 %v505, %v523
  %v525 = vpop.f32.mrf.mxu0
  %v526 = vadd.f32 %v507, %v525
  %527 = vdwg.mxu0
  %528 = vmatpush.bf16.msra.mxu0 %v339
  %529 = vmatpush.bf16.msra.mxu0 %v337
  %530 = vmatpush.bf16.msra.mxu0 %v335
  %531 = vmatpush.bf16.msra.mxu0 %v333
  %532 = vmatpush.bf16.msra.mxu0 %v331
  %533 = vmatpush.bf16.msra.mxu0 %v329
  %534 = vmatpush.bf16.msra.mxu0 %v327
  %535 = vmatpush.bf16.msra.mxu0 %v325
  %536 = vmatmul.bf16.gmra.mxu0 %v116
  %v537 = vpop.f32.mrf.mxu0
  %v538 = vadd.f32 %v89, %v537
  %v539 = vpop.f32.mrf.mxu0
  %v540 = vadd.f32 %v89, %v539
  %541 = vmatmul.bf16.gmra.mxu0 %v120
  %v542 = vpop.f32.mrf.mxu0
  %v543 = vadd.f32 %v89, %v542
  %v544 = vpop.f32.mrf.mxu0
  %v545 = vadd.f32 %v89, %v544
  %546 = vdwg.mxu0
  %547 = vmatpush.bf16.msra.mxu0 %v355
  %548 = vmatpush.bf16.msra.mxu0 %v353
  %549 = vmatpush.bf16.msra.mxu0 %v351
  %550 = vmatpush.bf16.msra.mxu0 %v349
  %551 = vmatpush.bf16.msra.mxu0 %v347
  %552 = vmatpush.bf16.msra.mxu0 %v345
  %553 = vmatpush.bf16.msra.mxu0 %v343
  %554 = vmatpush.bf16.msra.mxu0 %v341
  %555 = vmatmul.bf16.gmra.mxu0 %v117
  %v556 = vpop.f32.mrf.mxu0
  %v557 = vadd.f32 %v538, %v556
  %v558 = vpop.f32.mrf.mxu0
  %v559 = vadd.f32 %v540, %v558
  %560 = vmatmul.bf16.gmra.mxu0 %v121
  %v561 = vpop.f32.mrf.mxu0
  %v562 = vadd.f32 %v543, %v561
  %v563 = vpop.f32.mrf.mxu0
  %v564 = vadd.f32 %v545, %v563
  %565 = vdwg.mxu0
  %566 = vmatpush.bf16.msra.mxu0 %v371
  %567 = vmatpush.bf16.msra.mxu0 %v369
  %568 = vmatpush.bf16.msra.mxu0 %v367
  %569 = vmatpush.bf16.msra.mxu0 %v365
  %570 = vmatpush.bf16.msra.mxu0 %v363
  %571 = vmatpush.bf16.msra.mxu0 %v361
  %572 = vmatpush.bf16.msra.mxu0 %v359
  %573 = vmatpush.bf16.msra.mxu0 %v357
  %574 = vmatmul.bf16.gmra.mxu0 %v118
  %v575 = vpop.f32.mrf.mxu0
  %v576 = vadd.f32 %v557, %v575
  %v577 = vpop.f32.mrf.mxu0
  %v578 = vadd.f32 %v559, %v577
  %579 = vmatmul.bf16.gmra.mxu0 %v122
  %v580 = vpop.f32.mrf.mxu0
  %v581 = vadd.f32 %v562, %v580
  %v582 = vpop.f32.mrf.mxu0
  %v583 = vadd.f32 %v564, %v582
  %584 = vdwg.mxu0
  %585 = vmatpush.bf16.msra.mxu0 %v387
  %586 = vmatpush.bf16.msra.mxu0 %v385
  %587 = vmatpush.bf16.msra.mxu0 %v383
  %588 = vmatpush.bf16.msra.mxu0 %v381
  %589 = vmatpush.bf16.msra.mxu0 %v379
  %590 = vmatpush.bf16.msra.mxu0 %v377
  %591 = vmatpush.bf16.msra.mxu0 %v375
  %592 = vmatpush.bf16.msra.mxu0 %v373
  %593 = vmatmul.bf16.gmra.mxu0 %v119
  %v594 = vpop.f32.mrf.mxu0
  %v595 = vadd.f32 %v576, %v594
  %v596 = vpop.f32.mrf.mxu0
  %v597 = vadd.f32 %v578, %v596
  %598 = vmatmul.bf16.gmra.mxu0 %v123
  %v599 = vpop.f32.mrf.mxu0
  %v600 = vadd.f32 %v581, %v599
  %v601 = vpop.f32.mrf.mxu0
  %v602 = vadd.f32 %v583, %v601
  %603 = vdwg.mxu0
  %v604 = vmax.f32 %v519, 0.0
  %v605 = vmax.f32 %v595, 0.0
  %v606 = vmax.f32 %v521, 0.0
  %v607 = vmax.f32 %v597, 0.0
  %v608 = vmax.f32 %v524, 0.0
  %v609 = vmax.f32 %v600, 0.0
  %v610 = vmax.f32 %v526, 0.0
  %v611 = vmax.f32 %v602, 0.0
  %612 = vst [vmem:[%s3] sm:$0xff] %v604
  %613 = vst [vmem:[%s3 + $0x8] sm:$0xff] %v605
  %614 = vst [vmem:[%s3 + $0x10] sm:$0xff] %v606
  %615 = vst [vmem:[%s3 + $0x18] sm:$0xff] %v607
  %616 = vst [vmem:[%s3 + $0x20] sm:$0xff] %v608
  %617 = vst [vmem:[%s3 + $0x28] sm:$0xff] %v609
  %618 = vst [vmem:[%s3 + $0x30] sm:$0xff] %v610
  %619 = vst [vmem:[%s3 + $0x38] sm:$0xff] %v611
  // Predicated region
  $region14: #{categorical_encoder_forward.1} parent=0 // pred_check
    _
  $region15: #{categorical_encoder_forward.1} parent=0 // pred_check_branch
    %621 = sbr.rel (0) target = $region17
  $region16: #{categorical_encoder_forward.1} parent=0 // pred_region
    _
  $region17: #{categorical_encoder_forward.1} parent=0 // pred_fallthru
    _
  // Predicated region
  $region18: #{categorical_encoder_forward.1} parent=0 // pred_check
    _
  $region19: #{categorical_encoder_forward.1} parent=0 // pred_check_branch
    %623 = sbr.rel (0) target = $region21
  $region20: #{categorical_encoder_forward.1} parent=0 // pred_region
    _
  $region21: #{categorical_encoder_forward.1} parent=0 // pred_fallthru
    _

</llo_original>
